<compile_context>
chip_gen: v5e
topology: v5e:2x2
jax: 0.10.0
libtpu: 0.0.40
codegen_flags: <defaults>
</compile_context>

<pallas_src>
import jax
import jax.numpy as jnp
from jax.experimental import pallas as pl
from jax.experimental.pallas import tpu as pltpu


# Lane-dense slab width (multiple of 128) and row-tile height.
# VMEM use = (2 in + 1 out) * 2 buffers * TM * LANE * 4 B = 12 MiB for f32.
_LANE = 1024
_TM = 512


def _gf_kernel(w_ref, a_ref, b_ref, o_ref):
    # w_ref: SMEM (2,) f32 holding (sigmoid(w0), sigmoid(w1)).
    # a_ref, b_ref, o_ref: (TM, LANE) VMEM tiles of the flattened slab.
    w1 = w_ref[0]
    w2 = w_ref[1]
    o_ref[...] = (w1 * a_ref[...] + w2 * b_ref[...]).astype(o_ref.dtype)


def gf_forward(weight, A, B):
    """JAX/Pallas equivalent of GF.forward.

    weight: (2,) float32 raw parameter (sigmoid applied here, as glue).
    A, B:   tensors of identical shape/dtype (NCHW in the PyTorch module).
    Returns w1*A + w2*B with (w1, w2) = sigmoid(weight).
    """
    assert A.shape == B.shape and A.dtype == B.dtype
    orig_shape = A.shape
    dtype = A.dtype
    total = int(A.size)

    # Parameter glue: sigmoid of the 2-element raw weight, kept in f32.
    ws = jax.nn.sigmoid(weight.astype(jnp.float32)).reshape(2)

    # Flatten to a lane-dense slab (rows, lane), independent of H*W, so the
    # output last dim is a large multiple of 128 (unmasked vst stores).
    lane = _LANE if total >= _LANE * 8 else 128
    rows = pl.cdiv(total, lane)
    tm = min(_TM, ((rows + 7) // 8) * 8)        # row tile, multiple of 8
    rows_p = ((rows + tm - 1) // tm) * tm       # rows padded to a tile multiple
    padded_total = rows_p * lane

    a_flat = A.reshape(-1)
    b_flat = B.reshape(-1)
    pad = padded_total - total
    if pad:
        a_flat = jnp.pad(a_flat, (0, pad))
        b_flat = jnp.pad(b_flat, (0, pad))
    A2 = a_flat.reshape(rows_p, lane)
    B2 = b_flat.reshape(rows_p, lane)

    out2 = pl.pallas_call(
        _gf_kernel,
        out_shape=jax.ShapeDtypeStruct((rows_p, lane), dtype),
        grid=(rows_p // tm,),
        in_specs=[
            pl.BlockSpec(memory_space=pltpu.SMEM),        # fused weights (scalars)
            pl.BlockSpec((tm, lane), lambda i: (i, 0)),   # A row-tile
            pl.BlockSpec((tm, lane), lambda i: (i, 0)),   # B row-tile
        ],
        out_specs=pl.BlockSpec((tm, lane), lambda i: (i, 0)),
        compiler_params=pltpu.CompilerParams(
            dimension_semantics=("parallel",),            # shard tiles on v7x's 2 TCs
            vmem_limit_bytes=32 * 1024 * 1024,            # raise v5e's 16 MiB default
        ),
    )(ws, A2, B2)

    out_flat = out2.reshape(-1)
    if pad:
        out_flat = out_flat[:total]
    return out_flat.reshape(orig_shape)


if __name__ == "__main__":
    key = jax.random.PRNGKey(0)
    k_w, k_a, k_b = jax.random.split(key, 3)

    # Deterministic "parameter" (matches nn.Parameter(torch.randn(2)) shape).
    weight = jax.random.normal(k_w, (2,), dtype=jnp.float32)

    # Small NCHW inputs.
    A = jax.random.normal(k_a, (2, 4, 16, 16), dtype=jnp.float32)
    B = jax.random.normal(k_b, (2, 4, 16, 16), dtype=jnp.float32)

    out = jax.block_until_ready(gf_forward(weight, A, B))

    # Reference check (pure JAX).
    w1, w2 = jax.nn.sigmoid(weight)
    ref = w1 * A + w2 * B
    assert out.shape == A.shape
    assert jnp.allclose(out, ref, atol=1e-6, rtol=1e-6)

    print("KERNEL_OK")
</pallas_src>

<mosaic_0001>
module attributes {stable_mosaic.version = 11 : i64} {
  func.func @_gf_kernel(%arg0: i32, %arg1: memref<2xf32, #tpu.memory_space<smem>>, %arg2: memref<16x128xf32, #tpu.memory_space<vmem>>, %arg3: memref<16x128xf32, #tpu.memory_space<vmem>>, %arg4: memref<16x128xf32, #tpu.memory_space<vmem>>) attributes {dimension_semantics = [#tpu.dimension_semantics<parallel>], iteration_bounds = array<i64: 1>, scalar_prefetch = 0 : i64, scratch_operands = 0 : i64, tpu.core_type = #tpu.core_type<tc>, window_params = [{transform_indices = @transform_0, window_bounds = array<i64: 2>}, {transform_indices = @transform_1, window_bounds = array<i64: 16, 128>}, {transform_indices = @transform_2, window_bounds = array<i64: 16, 128>}, {transform_indices = @transform_3, window_bounds = array<i64: 16, 128>}]} {
    %c0 = arith.constant 0 : index
    %0 = memref.load %arg1[%c0] : memref<2xf32, #tpu.memory_space<smem>>
    %c1 = arith.constant 1 : index
    %1 = memref.load %arg1[%c1] : memref<2xf32, #tpu.memory_space<smem>>
    %c0_0 = arith.constant 0 : index
    %c0_1 = arith.constant 0 : index
    %2 = vector.load %arg2[%c0_0, %c0_1] : memref<16x128xf32, #tpu.memory_space<vmem>>, vector<16x128xf32>
    %3 = vector.broadcast %0 : f32 to vector<16x128xf32>
    %4 = arith.mulf %3, %2 : vector<16x128xf32>
    %c0_2 = arith.constant 0 : index
    %c0_3 = arith.constant 0 : index
    %5 = vector.load %arg3[%c0_2, %c0_3] : memref<16x128xf32, #tpu.memory_space<vmem>>, vector<16x128xf32>
    %6 = vector.broadcast %1 : f32 to vector<16x128xf32>
    %7 = arith.mulf %6, %5 : vector<16x128xf32>
    %8 = arith.addf %4, %7 : vector<16x128xf32>
    %c0_4 = arith.constant 0 : index
    %c0_5 = arith.constant 0 : index
    %9 = vector.load %arg4[%c0_4, %c0_5] : memref<16x128xf32, #tpu.memory_space<vmem>>, vector<16x128xf32>
    tpu.vector_store %arg4[%c0_4, %c0_5], %8 {strides = array<i32>} : memref<16x128xf32, #tpu.memory_space<vmem>>, vector<16x128xf32>,
    return
  }
  func.func @transform_0(%arg0: i32) -> i32 {
    %c0_i32 = arith.constant 0 : i32
    %c0_i32_0 = arith.constant 0 : i32
    return %c0_i32 : i32
  }
  func.func @transform_1(%arg0: i32) -> (i32, i32) {
    %c0_i32 = arith.constant 0 : i32
    %c0_i32_0 = arith.constant 0 : i32
    return %arg0, %c0_i32 : i32, i32
  }
  func.func @transform_2(%arg0: i32) -> (i32, i32) {
    %c0_i32 = arith.constant 0 : i32
    %c0_i32_0 = arith.constant 0 : i32
    return %arg0, %c0_i32 : i32, i32
  }
  func.func @transform_3(%arg0: i32) -> (i32, i32) {
    %c0_i32 = arith.constant 0 : i32
    %c0_i32_0 = arith.constant 0 : i32
    return %arg0, %c0_i32 : i32, i32
  }
}

</mosaic_0001>

<llo_original>
// kernel: tpu_custom_call.1
$region0: #{tpu_custom_call.1}
  #allocation0 [shape = 'u32[]', space=smem, size = 0x4, offset = 0x4, fixed_abs, tag = 'smem constant byte address 0x4 - core index']
  #allocation1 [shape = 'u32[72,128]{1,0:T(1,128)}', space=vmem, size = 0x9000, scoped, tag = 'internal scratch']
  %s0 = inlined_call_operand.hbm [shape: f32[2], index: 0, kind: input, shape index: {}]
  %s1 = inlined_call_operand.hbm [shape: f32[16,128], index: 1, kind: input, shape index: {}]
  %s2 = inlined_call_operand.hbm [shape: f32[16,128], index: 2, kind: input, shape index: {}]
  %s3 = inlined_call_operand.hbm [shape: f32[16,128], index: 3, kind: output, shape index: {}]
  %s4 = sld [smem:[#allocation0]]
  $region34: #{tpu_custom_call.1} parent=0
    _
  %s6 = ssub.s32 1, %s4
  %s7 = scalar_select 0, %s6, %s4
  $region1: #{tpu_custom_call.1} parent=0
    #allocation2 [shape = 'u8[512]{0}', space=smem, size = 0x200, scoped, tag = 'input window, operand 0, single buffered']
    #allocation3 [shape = 's32[1]{0}', space=sflag, size = 0x4, scoped, tag = 'scoped memory for tpu_custom_call.1']
    #allocation4 [shape = 's32[1]{0}', space=sflag, size = 0x4, scoped, tag = 'scoped memory for tpu_custom_call.1']
    #allocation5 [shape = 's32[1]{0}', space=sflag, size = 0x4, scoped, tag = 'scoped memory for tpu_custom_call.1']
    #allocation6 [shape = 'u8[8192]{0}', space=vmem, size = 0x2000, scoped, tag = 'input window, operand 1, single buffered']
    #allocation7 [shape = 'u8[8192]{0}', space=vmem, size = 0x2000, scoped, tag = 'input window, operand 2, single buffered']
    #allocation8 [shape = 's32[1]{0}', space=sflag, size = 0x4, scoped, tag = 'scoped memory for tpu_custom_call.1']
    #allocation9 [shape = 'u8[8192]{0}', space=vmem, size = 0x2000, scoped, tag = 'output window, operand 0, single buffered']
    %8 = vsyncpa [#allocation5], 0
    %9 = vsyncpa [#allocation3], 0
    %10 = vsyncpa [#allocation8], 0
    %11 = vsyncpa [#allocation4], 0
    // Predicated region
    $region2: #{tpu_custom_call.1} parent=1 // pred_check
      _
    $region3: #{tpu_custom_call.1} parent=1 // pred_check_branch
      %13 = sbr.rel (0) target = $region5
    $region4: #{tpu_custom_call.1} parent=1 // pred_region
      %15 = vsyncadd [#allocation5], 0
      %s17 = sshll.u32 %s0, 4
      %s18 = int_to_ptr.hbm [resolvable:$true] %s17
      %20 = dma.hbm_to_smem %s18, 16, [#allocation2], [#allocation5]
    $region5: #{tpu_custom_call.1} parent=1 // pred_fallthru
      _
    // Predicated region
    $region6: #{tpu_custom_call.1} parent=1 // pred_check
      _
    $region7: #{tpu_custom_call.1} parent=1 // pred_check_branch
      %22 = sbr.rel (0) target = $region9
    $region8: #{tpu_custom_call.1} parent=1 // pred_region
      %24 = vsyncadd [#allocation3], 0
      %s25 = sshll.u32 %s1, 4
      %s26 = int_to_ptr.hbm [resolvable:$true] %s25
      %s27 = sshll.u32 [#allocation6], 4
      %s28 = int_to_ptr.vmem [resolvable:$true] %s27
      %33 = dma.hbm_to_vmem [thread:$0]  %s26, 256, %s28, [#allocation3], 128, 128, 8
    $region9: #{tpu_custom_call.1} parent=1 // pred_fallthru
      _
    // Predicated region
    $region10: #{tpu_custom_call.1} parent=1 // pred_check
      _
    $region11: #{tpu_custom_call.1} parent=1 // pred_check_branch
      %35 = sbr.rel (0) target = $region13
    $region12: #{tpu_custom_call.1} parent=1 // pred_region
      %37 = vsyncadd [#allocation8], 0
      %s38 = sshll.u32 %s2, 4
      %s39 = int_to_ptr.hbm [resolvable:$true] %s38
      %s40 = sshll.u32 [#allocation7], 4
      %s41 = int_to_ptr.vmem [resolvable:$true] %s40
      %46 = dma.hbm_to_vmem [thread:$0]  %s39, 256, %s41, [#allocation8], 128, 128, 8
    $region13: #{tpu_custom_call.1} parent=1 // pred_fallthru
      _
    // Predicated region
    $region14: #{tpu_custom_call.1} parent=1 // pred_check
      _
    $region15: #{tpu_custom_call.1} parent=1 // pred_check_branch
      %48 = sbr.rel (0) target = $region17
    $region16: #{tpu_custom_call.1} parent=1 // pred_region
      %50 = dma.done [#allocation5], 16
    $region17: #{tpu_custom_call.1} parent=1 // pred_fallthru
      _
    // Predicated region
    $region18: #{tpu_custom_call.1} parent=1 // pred_check
      _
    $region19: #{tpu_custom_call.1} parent=1 // pred_check_branch
      %52 = sbr.rel (0) target = $region21
    $region20: #{tpu_custom_call.1} parent=1 // pred_region
      %54 = dma.done [#allocation3], 256
    $region21: #{tpu_custom_call.1} parent=1 // pred_fallthru
      _
    // Predicated region
    $region22: #{tpu_custom_call.1} parent=1 // pred_check
      _
    $region23: #{tpu_custom_call.1} parent=1 // pred_check_branch
      %56 = sbr.rel (0) target = $region25
    $region24: #{tpu_custom_call.1} parent=1 // pred_region
      %58 = dma.done [#allocation8], 256
    $region25: #{tpu_custom_call.1} parent=1 // pred_fallthru
      _
    %59 = sfence
    %s60 = sld [smem:[#allocation2]]
    %s61 = sld [smem:[#allocation2 + $0x1]]
    %v62 = vld [vmem:[#allocation6] sm:$0xff]
    %v63 = vld [vmem:[#allocation6 + $0x8] sm:$0xff]
    %v64 = vstv %s60
    %v65 = vmul.f32 %v64, %v62
    %v66 = vmul.f32 %v64, %v63
    %v67 = vld [vmem:[#allocation7] sm:$0xff]
    %v68 = vld [vmem:[#allocation7 + $0x8] sm:$0xff]
    %v69 = vstv %s61
    %v70 = vmul.f32 %v69, %v67
    %v71 = vmul.f32 %v69, %v68
    %v72 = vadd.f32 %v65, %v70
    %v73 = vadd.f32 %v66, %v71
    %74 = vst [vmem:[#allocation9] sm:$0xff] %v72
    %75 = vst [vmem:[#allocation9 + $0x8] sm:$0xff] %v73
    // Predicated region
    $region26: #{tpu_custom_call.1} parent=1 // pred_check
      _
    $region27: #{tpu_custom_call.1} parent=1 // pred_check_branch
      %77 = sbr.rel (0) target = $region29
    $region28: #{tpu_custom_call.1} parent=1 // pred_region
      %79 = vsyncadd [#allocation4], 0
      %s80 = sshll.u32 [#allocation9], 4
      %s81 = int_to_ptr.vmem [resolvable:$true] %s80
      %s82 = sshll.u32 %s3, 4
      %s83 = int_to_ptr.hbm [resolvable:$true] %s82
      %88 = dma.vmem_to_hbm [thread:$0]  %s81, 256, %s83, [#allocation4], 128, 128, 8
    $region29: #{tpu_custom_call.1} parent=1 // pred_fallthru
      _
    // Predicated region
    $region30: #{tpu_custom_call.1} parent=1 // pred_check
      _
    $region31: #{tpu_custom_call.1} parent=1 // pred_check_branch
      %90 = sbr.rel (0) target = $region33
    $region32: #{tpu_custom_call.1} parent=1 // pred_region
      %92 = dma.done [#allocation4], 256
    $region33: #{tpu_custom_call.1} parent=1 // pred_fallthru
      _
    %93 = vsyncpa [#allocation3], 1
    %94 = vsyncpa [#allocation8], 1
    %95 = vsyncpa [#allocation4], 1
    %96 = vsyncpa [#allocation5], 1

</llo_original>
